<compile_context>
chip_gen: v6e
topology: v6e:2x2x1
jax: 0.10.0
libtpu: 0.0.40
codegen_flags: <defaults>
</compile_context>

<pallas_src>
import functools

import jax
import jax.numpy as jnp
from jax.experimental import pallas as pl
from jax.experimental.pallas import tpu as pltpu

INPUT_DIM = 77
HIDDEN_DIM = 256
OUTPUT_DIM = 768


def _round_up(x, m):
    return ((x + m - 1) // m) * m


def _choose_tm(mp):
    """Pick a row-tile that divides mp exactly (no padding waste), <=512 rows,
    and gives >=2 grid steps when mp >= 16 (keeps v7x's 2nd TC busy)."""
    if mp <= 8:
        return mp
    upper = min(mp // 2, 512)
    best, tm = 8, 8
    while tm <= upper:
        if mp % tm == 0:
            best = tm
        tm += 8
    return best


def _mlp_kernel(x_ref, w1_ref, b1_ref, w2_ref, b2_ref, o_ref):
    # x: (TM, 128) bf16; w1: (128, 256) bf16; w2: (256, 768) bf16; biases f32.
    h = jnp.dot(x_ref[...], w1_ref[...], preferred_element_type=jnp.float32)
    h = jnp.maximum(h + b1_ref[...], 0.0)          # bias + ReLU in f32
    # TODO(synk): Dropout(0.3) is identity in eval mode; training-mode random mask
    # (pltpu.prng_seed/prng_random_bits + 1/0.7 scale) not implemented.
    y = jnp.dot(h.astype(jnp.bfloat16), w2_ref[...],
                preferred_element_type=jnp.float32)
    o_ref[...] = (y + b2_ref[...]).astype(o_ref.dtype)   # bf16 writeback


def prepare_params(w1, b1, w2, b2):
    """One-time weight prep: K-pad w1 to 128 lanes, cast weights to bf16,
    reshape biases to (1, N) f32. Reuse the result across forward calls."""
    K, HID = w1.shape
    OUT = w2.shape[1]
    KP = _round_up(K, 128)
    w1_p = jnp.zeros((KP, HID), jnp.bfloat16).at[:K, :].set(w1.astype(jnp.bfloat16))
    w2_b = w2.astype(jnp.bfloat16)
    b1_r = b1.reshape(1, HID).astype(jnp.float32)
    b2_r = b2.reshape(1, OUT).astype(jnp.float32)
    return w1_p, b1_r, w2_b, b2_r


@jax.jit
def mlp_feature_extractor(x, params):
    """x: (B, 77) f32; params from prepare_params(). Returns (B, 768) bf16."""
    w1_p, b1_r, w2_b, b2_r = params
    M, K = x.shape
    KP, HID = w1_p.shape
    OUT = w2_b.shape[1]

    MP = _round_up(max(M, 8), 8)        # minimal sublane pad only
    TM = _choose_tm(MP)                 # divides MP exactly

    # Single fused pad+cast under this jit (mathematically exact: zero K-pad).
    x_p = jnp.pad(x.astype(jnp.bfloat16), ((0, MP - M), (0, KP - K)))

    cost = pl.CostEstimate(
        flops=2 * MP * (KP * HID + HID * OUT),
        transcendentals=0,
        bytes_accessed=(x_p.size * 2 + w1_p.size * 2 + w2_b.size * 2
                        + b1_r.size * 4 + b2_r.size * 4 + MP * OUT * 2),
    )

    out = pl.pallas_call(
        _mlp_kernel,
        out_shape=jax.ShapeDtypeStruct((MP, OUT), jnp.bfloat16),
        grid=(MP // TM,),
        in_specs=[
            pl.BlockSpec((TM, KP), lambda i: (i, 0)),
            pl.BlockSpec((KP, HID), lambda i: (0, 0)),
            pl.BlockSpec((1, HID), lambda i: (0, 0)),
            pl.BlockSpec((HID, OUT), lambda i: (0, 0)),
            pl.BlockSpec((1, OUT), lambda i: (0, 0)),
        ],
        out_specs=pl.BlockSpec((TM, OUT), lambda i: (i, 0)),
        compiler_params=pltpu.CompilerParams(
            dimension_semantics=("parallel",)),
        cost_estimate=cost,
    )(x_p, w1_p, b1_r, w2_b, b2_r)

    return out if MP == M else out[:M]


def _reference(x, w1, b1, w2, b2):
    # Pure-jnp reference using the same operand dtypes as the kernel.
    h = jnp.dot(x.astype(jnp.bfloat16), w1.astype(jnp.bfloat16),
                preferred_element_type=jnp.float32) + b1
    h = jnp.maximum(h, 0.0).astype(jnp.bfloat16)
    y = jnp.dot(h, w2.astype(jnp.bfloat16),
                preferred_element_type=jnp.float32) + b2
    return y


if __name__ == "__main__":
    key = jax.random.PRNGKey(0)
    k1, k2, k3, k4, kx = jax.random.split(key, 5)

    B = 8
    x = jax.random.normal(kx, (B, INPUT_DIM), jnp.float32)

    w1 = 0.02 * jax.random.normal(k1, (INPUT_DIM, HIDDEN_DIM), jnp.float32)
    b1 = 0.02 * jax.random.normal(k2, (HIDDEN_DIM,), jnp.float32)
    w2 = 0.02 * jax.random.normal(k3, (HIDDEN_DIM, OUTPUT_DIM), jnp.float32)
    b2 = 0.02 * jax.random.normal(k4, (OUTPUT_DIM,), jnp.float32)

    params = prepare_params(w1, b1, w2, b2)     # one-time weight prep
    out = mlp_feature_extractor(x, params)
    out = jax.block_until_ready(out)

    assert out.shape == (B, OUTPUT_DIM), out.shape
    assert out.dtype == jnp.bfloat16, out.dtype

    ref = _reference(x, w1, b1, w2, b2)
    assert jnp.allclose(out.astype(jnp.float32), ref, rtol=2e-2, atol=2e-2), \
        "mismatch vs jnp reference"

    print("KERNEL_OK")
</pallas_src>

<mosaic_0001>
module attributes {stable_mosaic.version = 11 : i64} {
  func.func @_mlp_kernel(%arg0: i32, %arg1: memref<8x128xbf16, #tpu.memory_space<vmem>>, %arg2: memref<128x256xbf16, #tpu.memory_space<vmem>>, %arg3: memref<1x256xf32, #tpu.memory_space<vmem>>, %arg4: memref<256x768xbf16, #tpu.memory_space<vmem>>, %arg5: memref<1x768xf32, #tpu.memory_space<vmem>>, %arg6: memref<8x768xbf16, #tpu.memory_space<vmem>>) attributes {dimension_semantics = [#tpu.dimension_semantics<parallel>], iteration_bounds = array<i64: 1>, scalar_prefetch = 0 : i64, scratch_operands = 0 : i64, tpu.core_type = #tpu.core_type<tc>, window_params = [{transform_indices = @transform_0, window_bounds = array<i64: 8, 128>}, {pipeline_mode = #tpu.pipeline_mode<synchronous>, transform_indices = @transform_1, window_bounds = array<i64: 128, 256>}, {pipeline_mode = #tpu.pipeline_mode<synchronous>, transform_indices = @transform_2, window_bounds = array<i64: 1, 256>}, {pipeline_mode = #tpu.pipeline_mode<synchronous>, transform_indices = @transform_3, window_bounds = array<i64: 256, 768>}, {pipeline_mode = #tpu.pipeline_mode<synchronous>, transform_indices = @transform_4, window_bounds = array<i64: 1, 768>}, {transform_indices = @transform_5, window_bounds = array<i64: 8, 768>}]} {
    %c0 = arith.constant 0 : index
    %c0_0 = arith.constant 0 : index
    %0 = vector.load %arg1[%c0, %c0_0] : memref<8x128xbf16, #tpu.memory_space<vmem>>, vector<8x128xbf16>
    %c0_1 = arith.constant 0 : index
    %c0_2 = arith.constant 0 : index
    %1 = vector.load %arg2[%c0_1, %c0_2] : memref<128x256xbf16, #tpu.memory_space<vmem>>, vector<128x256xbf16>
    %cst = arith.constant dense<0.000000e+00> : vector<8x256xf32>
    %2 = tpu.matmul %0, %1, %cst {dimension_numbers = #tpu.dot_dimension_numbers<[1], [0], [0], [1], [0, 0, 1, 1], [], []>} : vector<8x128xbf16>, vector<128x256xbf16>, vector<8x256xf32> -> vector<8x256xf32>
    %c0_3 = arith.constant 0 : index
    %c0_4 = arith.constant 0 : index
    %3 = vector.load %arg3[%c0_3, %c0_4] : memref<1x256xf32, #tpu.memory_space<vmem>>, vector<1x256xf32>
    %4 = vector.broadcast %3 : vector<1x256xf32> to vector<8x256xf32>
    %5 = arith.addf %2, %4 : vector<8x256xf32>
    %cst_5 = arith.constant 0.000000e+00 : f32
    %6 = vector.broadcast %cst_5 : f32 to vector<8x256xf32>
    %7 = arith.maximumf %5, %6 : vector<8x256xf32>
    %8 = arith.truncf %7 : vector<8x256xf32> to vector<8x256xbf16>
    %c0_6 = arith.constant 0 : index
    %c0_7 = arith.constant 0 : index
    %9 = vector.load %arg4[%c0_6, %c0_7] : memref<256x768xbf16, #tpu.memory_space<vmem>>, vector<256x768xbf16>
    %cst_8 = arith.constant dense<0.000000e+00> : vector<8x768xf32>
    %10 = tpu.matmul %8, %9, %cst_8 {dimension_numbers = #tpu.dot_dimension_numbers<[1], [0], [0], [1], [0, 0, 1, 1], [], []>} : vector<8x256xbf16>, vector<256x768xbf16>, vector<8x768xf32> -> vector<8x768xf32>
    %c0_9 = arith.constant 0 : index
    %c0_10 = arith.constant 0 : index
    %11 = vector.load %arg5[%c0_9, %c0_10] : memref<1x768xf32, #tpu.memory_space<vmem>>, vector<1x768xf32>
    %12 = vector.broadcast %11 : vector<1x768xf32> to vector<8x768xf32>
    %13 = arith.addf %10, %12 : vector<8x768xf32>
    %14 = arith.truncf %13 : vector<8x768xf32> to vector<8x768xbf16>
    %c0_11 = arith.constant 0 : index
    %c0_12 = arith.constant 0 : index
    %15 = vector.load %arg6[%c0_11, %c0_12] : memref<8x768xbf16, #tpu.memory_space<vmem>>, vector<8x768xbf16>
    tpu.vector_store %arg6[%c0_11, %c0_12], %14 {strides = array<i32>} : memref<8x768xbf16, #tpu.memory_space<vmem>>, vector<8x768xbf16>,
    return
  }
  func.func @transform_0(%arg0: i32) -> (i32, i32) {
    %c0_i32 = arith.constant 0 : i32
    %c0_i32_0 = arith.constant 0 : i32
    return %arg0, %c0_i32 : i32, i32
  }
  func.func @transform_1(%arg0: i32) -> (i32, i32) {
    %c0_i32 = arith.constant 0 : i32
    %c0_i32_0 = arith.constant 0 : i32
    %c0_i32_1 = arith.constant 0 : i32
    return %c0_i32, %c0_i32_0 : i32, i32
  }
  func.func @transform_2(%arg0: i32) -> (i32, i32) {
    %c0_i32 = arith.constant 0 : i32
    %c0_i32_0 = arith.constant 0 : i32
    %c0_i32_1 = arith.constant 0 : i32
    return %c0_i32, %c0_i32_0 : i32, i32
  }
  func.func @transform_3(%arg0: i32) -> (i32, i32) {
    %c0_i32 = arith.constant 0 : i32
    %c0_i32_0 = arith.constant 0 : i32
    %c0_i32_1 = arith.constant 0 : i32
    return %c0_i32, %c0_i32_0 : i32, i32
  }
  func.func @transform_4(%arg0: i32) -> (i32, i32) {
    %c0_i32 = arith.constant 0 : i32
    %c0_i32_0 = arith.constant 0 : i32
    %c0_i32_1 = arith.constant 0 : i32
    return %c0_i32, %c0_i32_0 : i32, i32
  }
  func.func @transform_5(%arg0: i32) -> (i32, i32) {
    %c0_i32 = arith.constant 0 : i32
    %c0_i32_0 = arith.constant 0 : i32
    return %arg0, %c0_i32 : i32, i32
  }
}

</mosaic_0001>

<llo_original>
// kernel: mlp_feature_extractor.1
$region0: #{mlp_feature_extractor.1}
  #allocation0 [shape = 'u32[]', space=smem, size = 0x4, offset = 0x4, fixed_abs, tag = 'smem constant byte address 0x4 - core index']
  #allocation1 [shape = 'u32[144,128]{1,0:T(1,128)}', space=vmem, size = 0x12000, scoped, tag = 'internal scratch']
  %s0 = inlined_call_operand.vmem [shape: bf16[8,128], index: 0, kind: input, shape index: {}]
  %s1 = inlined_call_operand.hbm [shape: bf16[128,256], index: 1, kind: input, shape index: {}]
  %s2 = inlined_call_operand.vmem [shape: f32[1,256], index: 2, kind: input, shape index: {}]
  %s3 = inlined_call_operand.hbm [shape: bf16[256,768], index: 3, kind: input, shape index: {}]
  %s4 = inlined_call_operand.vmem [shape: f32[1,768], index: 4, kind: input, shape index: {}]
  %s5 = inlined_call_operand.hbm [shape: bf16[8,768], index: 5, kind: output, shape index: {}]
  %s6 = sld [smem:[#allocation0]]
  $region38: #{mlp_feature_extractor.1} parent=0
    _
  %s8 = ssub.s32 1, %s6
  %s9 = scalar_select 0, %s8, %s6
  $region1: #{mlp_feature_extractor.1} parent=0
    #allocation2 [shape = 'u8[65536]{0}', space=vmem, size = 0x10000, scoped, tag = 'input window, operand 1, single buffered']
    #allocation3 [shape = 's32[1]{0}', space=sflag, size = 0x4, scoped, tag = 'scoped memory for mlp_feature_extractor.1']
    #allocation4 [shape = 's32[1]{0}', space=sflag, size = 0x4, scoped, tag = 'scoped memory for mlp_feature_extractor.1']
    #allocation5 [shape = 'u8[393216]{0}', space=vmem, size = 0x60000, scoped, tag = 'input window, operand 3, single buffered']
    #allocation6 [shape = 's32[1]{0}', space=sflag, size = 0x4, scoped, tag = 'scoped memory for mlp_feature_extractor.1']
    #allocation7 [shape = 'u8[12288]{0}', space=vmem, size = 0x3000, scoped, tag = 'output window, operand 0, single buffered']
    %10 = vsyncpa [#allocation3], 0
    %11 = vsyncpa [#allocation6], 0
    %12 = vsyncpa [#allocation4], 0
    // Predicated region
    $region2: #{mlp_feature_extractor.1} parent=1 // pred_check
      _
    $region3: #{mlp_feature_extractor.1} parent=1 // pred_check_branch
      %14 = sbr.rel (0) target = $region5
    $region4: #{mlp_feature_extractor.1} parent=1 // pred_region
      _
    $region5: #{mlp_feature_extractor.1} parent=1 // pred_fallthru
      _
    // Predicated region
    $region6: #{mlp_feature_extractor.1} parent=1 // pred_check
      _
    $region7: #{mlp_feature_extractor.1} parent=1 // pred_check_branch
      %16 = sbr.rel (0) target = $region9
    $region8: #{mlp_feature_extractor.1} parent=1 // pred_region
      %s18 = ssub.s32 2048, 2048
      %19 = vsyncadd [#allocation3], %s18
      %s20 = sshll.u32 [#allocation2], 4
      %s21 = int_to_ptr.vmem [resolvable:$true] %s20
      %26 = dma.hbm_to_vmem [thread:$0]  %s1, 2048, %s21, [#allocation3], 128, 128, 8
    $region9: #{mlp_feature_extractor.1} parent=1 // pred_fallthru
      _
    // Predicated region
    $region10: #{mlp_feature_extractor.1} parent=1 // pred_check
      _
    $region11: #{mlp_feature_extractor.1} parent=1 // pred_check_branch
      %28 = sbr.rel (0) target = $region13
    $region12: #{mlp_feature_extractor.1} parent=1 // pred_region
      _
    $region13: #{mlp_feature_extractor.1} parent=1 // pred_fallthru
      _
    // Predicated region
    $region14: #{mlp_feature_extractor.1} parent=1 // pred_check
      _
    $region15: #{mlp_feature_extractor.1} parent=1 // pred_check_branch
      %30 = sbr.rel (0) target = $region17
    $region16: #{mlp_feature_extractor.1} parent=1 // pred_region
      %s32 = ssub.s32 12288, 12288
      %33 = vsyncadd [#allocation6], %s32
      %s34 = sshll.u32 [#allocation5], 4
      %s35 = int_to_ptr.vmem [resolvable:$true] %s34
      %40 = dma.hbm_to_vmem [thread:$0]  %s3, 12288, %s35, [#allocation6], 384, 384, 24
    $region17: #{mlp_feature_extractor.1} parent=1 // pred_fallthru
      _
    // Predicated region
    $region18: #{mlp_feature_extractor.1} parent=1 // pred_check
      _
    $region19: #{mlp_feature_extractor.1} parent=1 // pred_check_branch
      %42 = sbr.rel (0) target = $region21
    $region20: #{mlp_feature_extractor.1} parent=1 // pred_region
      _
    $region21: #{mlp_feature_extractor.1} parent=1 // pred_fallthru
      _
    // Predicated region
    $region22: #{mlp_feature_extractor.1} parent=1 // pred_check
      _
    $region23: #{mlp_feature_extractor.1} parent=1 // pred_check_branch
      %44 = sbr.rel (0) target = $region25
    $region24: #{mlp_feature_extractor.1} parent=1 // pred_region
      %45 = dma.done [#allocation3], 2048
    $region25: #{mlp_feature_extractor.1} parent=1 // pred_fallthru
      _
    // Predicated region
    $region26: #{mlp_feature_extractor.1} parent=1 // pred_check
      _
    $region27: #{mlp_feature_extractor.1} parent=1 // pred_check_branch
      %47 = sbr.rel (0) target = $region29
    $region28: #{mlp_feature_extractor.1} parent=1 // pred_region
      %48 = dma.done [#allocation6], 12288
    $region29: #{mlp_feature_extractor.1} parent=1 // pred_fallthru
      _
    %v50 = vld [vmem:[%s0] sm:$0xf]
    %v51 = vld [vmem:[#allocation2] sm:$0xff]
    %v52 = vld [vmem:[#allocation2 + $0x8] sm:$0xff]
    %v53 = vld [vmem:[#allocation2 + $0x10] sm:$0xff]
    %v54 = vld [vmem:[#allocation2 + $0x18] sm:$0xff]
    %v55 = vld [vmem:[#allocation2 + $0x20] sm:$0xff]
    %v56 = vld [vmem:[#allocation2 + $0x28] sm:$0xff]
    %v57 = vld [vmem:[#allocation2 + $0x30] sm:$0xff]
    %v58 = vld [vmem:[#allocation2 + $0x38] sm:$0xff]
    %v59 = vld [vmem:[#allocation2 + $0x40] sm:$0xff]
    %v60 = vld [vmem:[#allocation2 + $0x48] sm:$0xff]
    %v61 = vld [vmem:[#allocation2 + $0x50] sm:$0xff]
    %v62 = vld [vmem:[#allocation2 + $0x58] sm:$0xff]
    %v63 = vld [vmem:[#allocation2 + $0x60] sm:$0xff]
    %v64 = vld [vmem:[#allocation2 + $0x68] sm:$0xff]
    %v65 = vld [vmem:[#allocation2 + $0x70] sm:$0xff]
    %v66 = vld [vmem:[#allocation2 + $0x78] sm:$0xff]
    %v67 = vld [vmem:[%s2] sm:$0x3]
    %v69 = vlaneseq
    %v70 = vshrl.u32 %v69, 7
    %v71 = vsub.s32 0, %v70
    %v72 = vrot.slane %v67, %v71
    %v73 = vlaneseq
    %v74 = vshrl.u32 %v73, 7
    %v75 = vsub.s32 1, %v74
    %v76 = vrot.slane %v67, %v75
    %v95 = vunpack.c.l.b16 %v51
    %v96 = vunpack.c.h.b16 %v51
    %v97 = vunpack.c.l.b16 %v52
    %v98 = vunpack.c.h.b16 %v52
    %v99 = vunpack.c.l.b16 %v53
    %v100 = vunpack.c.h.b16 %v53
    %v101 = vunpack.c.l.b16 %v54
    %v102 = vunpack.c.h.b16 %v54
    %v103 = vunpack.c.l.b16 %v55
    %v104 = vunpack.c.h.b16 %v55
    %v105 = vunpack.c.l.b16 %v56
    %v106 = vunpack.c.h.b16 %v56
    %v107 = vunpack.c.l.b16 %v57
    %v108 = vunpack.c.h.b16 %v57
    %v109 = vunpack.c.l.b16 %v58
    %v110 = vunpack.c.h.b16 %v58
    %v111 = vunpack.c.l.b16 %v59
    %v112 = vunpack.c.h.b16 %v59
    %v113 = vunpack.c.l.b16 %v60
    %v114 = vunpack.c.h.b16 %v60
    %v115 = vunpack.c.l.b16 %v61
    %v116 = vunpack.c.h.b16 %v61
    %v117 = vunpack.c.l.b16 %v62
    %v118 = vunpack.c.h.b16 %v62
    %v119 = vunpack.c.l.b16 %v63
    %v120 = vunpack.c.h.b16 %v63
    %v121 = vunpack.c.l.b16 %v64
    %v122 = vunpack.c.h.b16 %v64
    %v123 = vunpack.c.l.b16 %v65
    %v124 = vunpack.c.h.b16 %v65
    %v125 = vunpack.c.l.b16 %v66
    %v126 = vunpack.c.h.b16 %v66
    %v127 = vpack.c.b16 %v97, %v95
    %v128 = vpack.c.b16 %v98, %v96
    %v129 = vpack.c.b16 %v101, %v99
    %v130 = vpack.c.b16 %v102, %v100
    %v131 = vpack.c.b16 %v105, %v103
    %v132 = vpack.c.b16 %v106, %v104
    %v133 = vpack.c.b16 %v109, %v107
    %v134 = vpack.c.b16 %v110, %v108
    %v135 = vpack.c.b16 %v113, %v111
    %v136 = vpack.c.b16 %v114, %v112
    %v137 = vpack.c.b16 %v117, %v115
    %v138 = vpack.c.b16 %v118, %v116
    %v139 = vpack.c.b16 %v121, %v119
    %v140 = vpack.c.b16 %v122, %v120
    %v141 = vpack.c.b16 %v125, %v123
    %v142 = vpack.c.b16 %v126, %v124
    %159 = vmatprep.subr.bf16.mxu0 %v142
    %160 = vmatpush1.bf16.msra.mxu0 %v141
    %161 = vmatprep.subr.bf16.mxu0 %v140
    %162 = vmatpush1.bf16.msra.mxu0 %v139
    %163 = vmatprep.subr.bf16.mxu0 %v138
    %164 = vmatpush1.bf16.msra.mxu0 %v137
    %165 = vmatprep.subr.bf16.mxu0 %v136
    %166 = vmatpush1.bf16.msra.mxu0 %v135
    %167 = vmatprep.subr.bf16.mxu0 %v134
    %168 = vmatpush1.bf16.msra.mxu0 %v133
    %169 = vmatprep.subr.bf16.mxu0 %v132
    %170 = vmatpush1.bf16.msra.mxu0 %v131
    %171 = vmatprep.subr.bf16.mxu0 %v130
    %172 = vmatpush1.bf16.msra.mxu0 %v129
    %173 = vmatprep.subr.bf16.mxu0 %v128
    %174 = vmatpush1.bf16.msra.mxu0 %v127
    %175 = vmatprep.subr.bf16.mxu0 0
    %176 = vmatpush2.bf16.msra.mxu0 0
    %177 = vmatprep.subr.bf16.mxu0 0
    %178 = vmatpush2.bf16.msra.mxu0 0
    %179 = vmatprep.subr.bf16.mxu0 0
    %180 = vmatpush2.bf16.msra.mxu0 0
    %181 = vmatprep.subr.bf16.mxu0 0
    %182 = vmatpush2.bf16.msra.mxu0 0
    %183 = vmatprep.subr.bf16.mxu0 0
    %184 = vmatpush2.bf16.msra.mxu0 0
    %185 = vmatprep.subr.bf16.mxu0 0
    %186 = vmatpush2.bf16.msra.mxu0 0
    %187 = vmatprep.subr.bf16.mxu0 0
    %188 = vmatpush2.bf16.msra.mxu0 0
    %189 = vmatprep.subr.bf16.mxu0 0
    %190 = vmatpush2.bf16.msra.mxu0 0
    %191 = vmatprep.mubr.bf16.mxu0 0
    %192 = vmatmul.mubr.bf16.gmra.mxu0 %v50
    %v193 = vpop.f32.mrf.mxu0
    %v194 = vadd.f32 %v72, %v193
    %v195 = vpop.f32.mrf.mxu0
    %v196 = vadd.f32 %v76, %v195
    %v197 = vpop.f32.mrf.mxu0
    %v198 = vpop.f32.mrf.mxu0
    %199 = vdwg.mxu0
    %v200 = vmax.f32 %v194, 0.0
    %v201 = vmax.f32 %v196, 0.0
    %v202 = vpack.c.bf16 %v200, %v200
    %v203 = vpack.c.bf16 %v201, %v201
    %v204 = vld [vmem:[#allocation5] sm:$0xff]
    %v205 = vld [vmem:[#allocation5 + $0x8] sm:$0xff]
    %v206 = vld [vmem:[#allocation5 + $0x10] sm:$0xff]
    %v207 = vld [vmem:[#allocation5 + $0x18] sm:$0xff]
    %v208 = vld [vmem:[#allocation5 + $0x20] sm:$0xff]
    %v209 = vld [vmem:[#allocation5 + $0x28] sm:$0xff]
    %v210 = vld [vmem:[#allocation5 + $0x30] sm:$0xff]
    %v211 = vld [vmem:[#allocation5 + $0x38] sm:$0xff]
    %v212 = vld [vmem:[#allocation5 + $0x40] sm:$0xff]
    %v213 = vld [vmem:[#allocation5 + $0x48] sm:$0xff]
    %v214 = vld [vmem:[#allocation5 + $0x50] sm:$0xff]
    %v215 = vld [vmem:[#allocation5 + $0x58] sm:$0xff]
    %v216 = vld [vmem:[#allocation5 + $0x60] sm:$0xff]
    %v217 = vld [vmem:[#allocation5 + $0x68] sm:$0xff]
    %v218 = vld [vmem:[#allocation5 + $0x70] sm:$0xff]
    %v219 = vld [vmem:[#allocation5 + $0x78] sm:$0xff]
    %v220 = vld [vmem:[#allocation5 + $0x80] sm:$0xff]
    %v221 = vld [vmem:[#allocation5 + $0x88] sm:$0xff]
    %v222 = vld [vmem:[#allocation5 + $0x90] sm:$0xff]
    %v223 = vld [vmem:[#allocation5 + $0x98] sm:$0xff]
    %v224 = vld [vmem:[#allocation5 + $0xa0] sm:$0xff]
    %v225 = vld [vmem:[#allocation5 + $0xa8] sm:$0xff]
    %v226 = vld [vmem:[#allocation5 + $0xb0] sm:$0xff]
    %v227 = vld [vmem:[#allocation5 + $0xb8] sm:$0xff]
    %v228 = vld [vmem:[#allocation5 + $0xc0] sm:$0xff]
    %v229 = vld [vmem:[#allocation5 + $0xc8] sm:$0xff]
    %v230 = vld [vmem:[#allocation5 + $0xd0] sm:$0xff]
    %v231 = vld [vmem:[#allocation5 + $0xd8] sm:$0xff]
    %v232 = vld [vmem:[#allocation5 + $0xe0] sm:$0xff]
    %v233 = vld [vmem:[#allocation5 + $0xe8] sm:$0xff]
    %v234 = vld [vmem:[#allocation5 + $0xf0] sm:$0xff]
    %v235 = vld [vmem:[#allocation5 + $0xf8] sm:$0xff]
    %v236 = vld [vmem:[#allocation5 + $0x100] sm:$0xff]
    %v237 = vld [vmem:[#allocation5 + $0x108] sm:$0xff]
    %v238 = vld [vmem:[#allocation5 + $0x110] sm:$0xff]
    %v239 = vld [vmem:[#allocation5 + $0x118] sm:$0xff]
    %v240 = vld [vmem:[#allocation5 + $0x120] sm:$0xff]
    %v241 = vld [vmem:[#allocation5 + $0x128] sm:$0xff]
    %v242 = vld [vmem:[#allocation5 + $0x130] sm:$0xff]
    %v243 = vld [vmem:[#allocation5 + $0x138] sm:$0xff]
    %v244 = vld [vmem:[#allocation5 + $0x140] sm:$0xff]
    %v245 = vld [vmem:[#allocation5 + $0x148] sm:$0xff]
    %v246 = vld [vmem:[#allocation5 + $0x150] sm:$0xff]
    %v247 = vld [vmem:[#allocation5 + $0x158] sm:$0xff]
    %v248 = vld [vmem:[#allocation5 + $0x160] sm:$0xff]
    %v249 = vld [vmem:[#allocation5 + $0x168] sm:$0xff]
    %v250 = vld [vmem:[#allocation5 + $0x170] sm:$0xff]
    %v251 = vld [vmem:[#allocation5 + $0x178] sm:$0xff]
    %v252 = vld [vmem:[#allocation5 + $0x180] sm:$0xff]
    %v253 = vld [vmem:[#allocation5 + $0x188] sm:$0xff]
    %v254 = vld [vmem:[#allocation5 + $0x190] sm:$0xff]
    %v255 = vld [vmem:[#allocation5 + $0x198] sm:$0xff]
    %v256 = vld [vmem:[#allocation5 + $0x1a0] sm:$0xff]
    %v257 = vld [vmem:[#allocation5 + $0x1a8] sm:$0xff]
    %v258 = vld [vmem:[#allocation5 + $0x1b0] sm:$0xff]
    %v259 = vld [vmem:[#allocation5 + $0x1b8] sm:$0xff]
    %v260 = vld [vmem:[#allocation5 + $0x1c0] sm:$0xff]
    %v261 = vld [vmem:[#allocation5 + $0x1c8] sm:$0xff]
    %v262 = vld [vmem:[#allocation5 + $0x1d0] sm:$0xff]
    %v263 = vld [vmem:[#allocation5 + $0x1d8] sm:$0xff]
    %v264 = vld [vmem:[#allocation5 + $0x1e0] sm:$0xff]
    %v265 = vld [vmem:[#allocation5 + $0x1e8] sm:$0xff]
    %v266 = vld [vmem:[#allocation5 + $0x1f0] sm:$0xff]
    %v267 = vld [vmem:[#allocation5 + $0x1f8] sm:$0xff]
    %v268 = vld [vmem:[#allocation5 + $0x200] sm:$0xff]
    %v269 = vld [vmem:[#allocation5 + $0x208] sm:$0xff]
    %v270 = vld [vmem:[#allocation5 + $0x210] sm:$0xff]
    %v271 = vld [vmem:[#allocation5 + $0x218] sm:$0xff]
    %v272 = vld [vmem:[#allocation5 + $0x220] sm:$0xff]
    %v273 = vld [vmem:[#allocation5 + $0x228] sm:$0xff]
    %v274 = vld [vmem:[#allocation5 + $0x230] sm:$0xff]
    %v275 = vld [vmem:[#allocation5 + $0x238] sm:$0xff]
    %v276 = vld [vmem:[#allocation5 + $0x240] sm:$0xff]
    %v277 = vld [vmem:[#allocation5 + $0x248] sm:$0xff]
    %v278 = vld [vmem:[#allocation5 + $0x250] sm:$0xff]
    %v279 = vld [vmem:[#allocation5 + $0x258] sm:$0xff]
    %v280 = vld [vmem:[#allocation5 + $0x260] sm:$0xff]
    %v281 = vld [vmem:[#allocation5 + $0x268] sm:$0xff]
    %v282 = vld [vmem:[#allocation5 + $0x270] sm:$0xff]
    %v283 = vld [vmem:[#allocation5 + $0x278] sm:$0xff]
    %v284 = vld [vmem:[#allocation5 + $0x280] sm:$0xff]
    %v285 = vld [vmem:[#allocation5 + $0x288] sm:$0xff]
    %v286 = vld [vmem:[#allocation5 + $0x290] sm:$0xff]
    %v287 = vld [vmem:[#allocation5 + $0x298] sm:$0xff]
    %v288 = vld [vmem:[#allocation5 + $0x2a0] sm:$0xff]
    %v289 = vld [vmem:[#allocation5 + $0x2a8] sm:$0xff]
    %v290 = vld [vmem:[#allocation5 + $0x2b0] sm:$0xff]
    %v291 = vld [vmem:[#allocation5 + $0x2b8] sm:$0xff]
    %v292 = vld [vmem:[#allocation5 + $0x2c0] sm:$0xff]
    %v293 = vld [vmem:[#allocation5 + $0x2c8] sm:$0xff]
    %v294 = vld [vmem:[#allocation5 + $0x2d0] sm:$0xff]
    %v295 = vld [vmem:[#allocation5 + $0x2d8] sm:$0xff]
    %v296 = vld [vmem:[#allocation5 + $0x2e0] sm:$0xff]
    %v297 = vld [vmem:[#allocation5 + $0x2e8] sm:$0xff]
    %v298 = vld [vmem:[#allocation5 + $0x2f0] sm:$0xff]
    %v299 = vld [vmem:[#allocation5 + $0x2f8] sm:$0xff]
    %v300 = vld [vmem:[%s4] sm:$0x3f]
    %v302 = vlaneseq
    %v303 = vshrl.u32 %v302, 7
    %v304 = vsub.s32 0, %v303
    %v305 = vrot.slane %v300, %v304
    %v306 = vlaneseq
    %v307 = vshrl.u32 %v306, 7
    %v308 = vsub.s32 1, %v307
    %v309 = vrot.slane %v300, %v308
    %v310 = vlaneseq
    %v311 = vshrl.u32 %v310, 7
    %v312 = vsub.s32 2, %v311
    %v313 = vrot.slane %v300, %v312
    %v314 = vlaneseq
    %v315 = vshrl.u32 %v314, 7
    %v316 = vsub.s32 3, %v315
    %v317 = vrot.slane %v300, %v316
    %v318 = vlaneseq
    %v319 = vshrl.u32 %v318, 7
    %v320 = vsub.s32 4, %v319
    %v321 = vrot.slane %v300, %v320
    %v322 = vlaneseq
    %v323 = vshrl.u32 %v322, 7
    %v324 = vsub.s32 5, %v323
    %v325 = vrot.slane %v300, %v324
    %v428 = vunpack.c.l.b16 %v204
    %v429 = vunpack.c.h.b16 %v204
    %v430 = vunpack.c.l.b16 %v205
    %v431 = vunpack.c.h.b16 %v205
    %v432 = vunpack.c.l.b16 %v206
    %v433 = vunpack.c.h.b16 %v206
    %v434 = vunpack.c.l.b16 %v207
    %v435 = vunpack.c.h.b16 %v207
    %v436 = vunpack.c.l.b16 %v208
    %v437 = vunpack.c.h.b16 %v208
    %v438 = vunpack.c.l.b16 %v209
    %v439 = vunpack.c.h.b16 %v209
    %v440 = vunpack.c.l.b16 %v210
    %v441 = vunpack.c.h.b16 %v210
    %v442 = vunpack.c.l.b16 %v211
    %v443 = vunpack.c.h.b16 %v211
    %v444 = vunpack.c.l.b16 %v212
    %v445 = vunpack.c.h.b16 %v212
    %v446 = vunpack.c.l.b16 %v213
    %v447 = vunpack.c.h.b16 %v213
    %v448 = vunpack.c.l.b16 %v214
    %v449 = vunpack.c.h.b16 %v214
    %v450 = vunpack.c.l.b16 %v215
    %v451 = vunpack.c.h.b16 %v215
    %v452 = vunpack.c.l.b16 %v216
    %v453 = vunpack.c.h.b16 %v216
    %v454 = vunpack.c.l.b16 %v217
    %v455 = vunpack.c.h.b16 %v217
    %v456 = vunpack.c.l.b16 %v218
    %v457 = vunpack.c.h.b16 %v218
    %v458 = vunpack.c.l.b16 %v219
    %v459 = vunpack.c.h.b16 %v219
    %v460 = vunpack.c.l.b16 %v220
    %v461 = vunpack.c.h.b16 %v220
    %v462 = vunpack.c.l.b16 %v221
    %v463 = vunpack.c.h.b16 %v221
    %v464 = vunpack.c.l.b16 %v222
    %v465 = vunpack.c.h.b16 %v222
    %v466 = vunpack.c.l.b16 %v223
    %v467 = vunpack.c.h.b16 %v223
    %v468 = vunpack.c.l.b16 %v224
    %v469 = vunpack.c.h.b16 %v224
    %v470 = vunpack.c.l.b16 %v225
    %v471 = vunpack.c.h.b16 %v225
    %v472 = vunpack.c.l.b16 %v226
    %v473 = vunpack.c.h.b16 %v226
    %v474 = vunpack.c.l.b16 %v227
    %v475 = vunpack.c.h.b16 %v227
    %v476 = vunpack.c.l.b16 %v228
    %v477 = vunpack.c.h.b16 %v228
    %v478 = vunpack.c.l.b16 %v229
    %v479 = vunpack.c.h.b16 %v229
    %v480 = vunpack.c.l.b16 %v230
    %v481 = vunpack.c.h.b16 %v230
    %v482 = vunpack.c.l.b16 %v231
    %v483 = vunpack.c.h.b16 %v231
    %v484 = vunpack.c.l.b16 %v232
    %v485 = vunpack.c.h.b16 %v232
    %v486 = vunpack.c.l.b16 %v233
    %v487 = vunpack.c.h.b16 %v233
    %v488 = vunpack.c.l.b16 %v234
    %v489 = vunpack.c.h.b16 %v234
    %v490 = vunpack.c.l.b16 %v235
    %v491 = vunpack.c.h.b16 %v235
    %v492 = vunpack.c.l.b16 %v236
    %v493 = vunpack.c.h.b16 %v236
    %v494 = vunpack.c.l.b16 %v237
    %v495 = vunpack.c.h.b16 %v237
    %v496 = vunpack.c.l.b16 %v238
    %v497 = vunpack.c.h.b16 %v238
    %v498 = vunpack.c.l.b16 %v239
    %v499 = vunpack.c.h.b16 %v239
    %v500 = vunpack.c.l.b16 %v240
    %v501 = vunpack.c.h.b16 %v240
    %v502 = vunpack.c.l.b16 %v241
    %v503 = vunpack.c.h.b16 %v241
    %v504 = vunpack.c.l.b16 %v242
    %v505 = vunpack.c.h.b16 %v242
    %v506 = vunpack.c.l.b16 %v243
    %v507 = vunpack.c.h.b16 %v243
    %v508 = vunpack.c.l.b16 %v244
    %v509 = vunpack.c.h.b16 %v244
    %v510 = vunpack.c.l.b16 %v245
    %v511 = vunpack.c.h.b16 %v245
    %v512 = vunpack.c.l.b16 %v246
    %v513 = vunpack.c.h.b16 %v246
    %v514 = vunpack.c.l.b16 %v247
    %v515 = vunpack.c.h.b16 %v247
    %v516 = vunpack.c.l.b16 %v248
    %v517 = vunpack.c.h.b16 %v248
    %v518 = vunpack.c.l.b16 %v249
    %v519 = vunpack.c.h.b16 %v249
    %v520 = vunpack.c.l.b16 %v250
    %v521 = vunpack.c.h.b16 %v250
    %v522 = vunpack.c.l.b16 %v251
    %v523 = vunpack.c.h.b16 %v251
    %v524 = vunpack.c.l.b16 %v252
    %v525 = vunpack.c.h.b16 %v252
    %v526 = vunpack.c.l.b16 %v253
    %v527 = vunpack.c.h.b16 %v253
    %v528 = vunpack.c.l.b16 %v254
    %v529 = vunpack.c.h.b16 %v254
    %v530 = vunpack.c.l.b16 %v255
    %v531 = vunpack.c.h.b16 %v255
    %v532 = vunpack.c.l.b16 %v256
    %v533 = vunpack.c.h.b16 %v256
    %v534 = vunpack.c.l.b16 %v257
    %v535 = vunpack.c.h.b16 %v257
    %v536 = vunpack.c.l.b16 %v258
    %v537 = vunpack.c.h.b16 %v258
    %v538 = vunpack.c.l.b16 %v259
    %v539 = vunpack.c.h.b16 %v259
    %v540 = vunpack.c.l.b16 %v260
    %v541 = vunpack.c.h.b16 %v260
    %v542 = vunpack.c.l.b16 %v261
    %v543 = vunpack.c.h.b16 %v261
    %v544 = vunpack.c.l.b16 %v262
    %v545 = vunpack.c.h.b16 %v262
    %v546 = vunpack.c.l.b16 %v263
    %v547 = vunpack.c.h.b16 %v263
    %v548 = vunpack.c.l.b16 %v264
    %v549 = vunpack.c.h.b16 %v264
    %v550 = vunpack.c.l.b16 %v265
    %v551 = vunpack.c.h.b16 %v265
    %v552 = vunpack.c.l.b16 %v266
    %v553 = vunpack.c.h.b16 %v266
    %v554 = vunpack.c.l.b16 %v267
    %v555 = vunpack.c.h.b16 %v267
    %v556 = vunpack.c.l.b16 %v268
    %v557 = vunpack.c.h.b16 %v268
    %v558 = vunpack.c.l.b16 %v269
    %v559 = vunpack.c.h.b16 %v269
    %v560 = vunpack.c.l.b16 %v270
    %v561 = vunpack.c.h.b16 %v270
    %v562 = vunpack.c.l.b16 %v271
    %v563 = vunpack.c.h.b16 %v271
    %v564 = vunpack.c.l.b16 %v272
    %v565 = vunpack.c.h.b16 %v272
    %v566 = vunpack.c.l.b16 %v273
    %v567 = vunpack.c.h.b16 %v273
    %v568 = vunpack.c.l.b16 %v274
    %v569 = vunpack.c.h.b16 %v274
    %v570 = vunpack.c.l.b16 %v275
    %v571 = vunpack.c.h.b16 %v275
    %v572 = vunpack.c.l.b16 %v276
    %v573 = vunpack.c.h.b16 %v276
    %v574 = vunpack.c.l.b16 %v277
    %v575 = vunpack.c.h.b16 %v277
    %v576 = vunpack.c.l.b16 %v278
    %v577 = vunpack.c.h.b16 %v278
    %v578 = vunpack.c.l.b16 %v279
    %v579 = vunpack.c.h.b16 %v279
    %v580 = vunpack.c.l.b16 %v280
    %v581 = vunpack.c.h.b16 %v280
    %v582 = vunpack.c.l.b16 %v281
    %v583 = vunpack.c.h.b16 %v281
    %v584 = vunpack.c.l.b16 %v282
    %v585 = vunpack.c.h.b16 %v282
    %v586 = vunpack.c.l.b16 %v283
    %v587 = vunpack.c.h.b16 %v283
    %v588 = vunpack.c.l.b16 %v284
    %v589 = vunpack.c.h.b16 %v284
    %v590 = vunpack.c.l.b16 %v285
    %v591 = vunpack.c.h.b16 %v285
    %v592 = vunpack.c.l.b16 %v286
    %v593 = vunpack.c.h.b16 %v286
    %v594 = vunpack.c.l.b16 %v287
    %v595 = vunpack.c.h.b16 %v287
    %v596 = vunpack.c.l.b16 %v288
    %v597 = vunpack.c.h.b16 %v288
    %v598 = vunpack.c.l.b16 %v289
    %v599 = vunpack.c.h.b16 %v289
    %v600 = vunpack.c.l.b16 %v290
    %v601 = vunpack.c.h.b16 %v290
    %v602 = vunpack.c.l.b16 %v291
    %v603 = vunpack.c.h.b16 %v291
    %v604 = vunpack.c.l.b16 %v292
    %v605 = vunpack.c.h.b16 %v292
    %v606 = vunpack.c.l.b16 %v293
    %v607 = vunpack.c.h.b16 %v293
    %v608 = vunpack.c.l.b16 %v294
    %v609 = vunpack.c.h.b16 %v294
    %v610 = vunpack.c.l.b16 %v295
    %v611 = vunpack.c.h.b16 %v295
    %v612 = vunpack.c.l.b16 %v296
    %v613 = vunpack.c.h.b16 %v296
    %v614 = vunpack.c.l.b16 %v297
    %v615 = vunpack.c.h.b16 %v297
    %v616 = vunpack.c.l.b16 %v298
    %v617 = vunpack.c.h.b16 %v298
    %v618 = vunpack.c.l.b16 %v299
    %v619 = vunpack.c.h.b16 %v299
    %v620 = vpack.c.b16 %v434, %v428
    %v621 = vpack.c.b16 %v435, %v429
    %v622 = vpack.c.b16 %v436, %v430
    %v623 = vpack.c.b16 %v437, %v431
    %v624 = vpack.c.b16 %v438, %v432
    %v625 = vpack.c.b16 %v439, %v433
    %v626 = vpack.c.b16 %v446, %v440
    %v627 = vpack.c.b16 %v447, %v441
    %v628 = vpack.c.b16 %v448, %v442
    %v629 = vpack.c.b16 %v449, %v443
    %v630 = vpack.c.b16 %v450, %v444
    %v631 = vpack.c.b16 %v451, %v445
    %v632 = vpack.c.b16 %v458, %v452
    %v633 = vpack.c.b16 %v459, %v453
    %v634 = vpack.c.b16 %v460, %v454
    %v635 = vpack.c.b16 %v461, %v455
    %v636 = vpack.c.b16 %v462, %v456
    %v637 = vpack.c.b16 %v463, %v457
    %v638 = vpack.c.b16 %v470, %v464
    %v639 = vpack.c.b16 %v471, %v465
    %v640 = vpack.c.b16 %v472, %v466
    %v641 = vpack.c.b16 %v473, %v467
    %v642 = vpack.c.b16 %v474, %v468
    %v643 = vpack.c.b16 %v475, %v469
    %v644 = vpack.c.b16 %v482, %v476
    %v645 = vpack.c.b16 %v483, %v477
    %v646 = vpack.c.b16 %v484, %v478
    %v647 = vpack.c.b16 %v485, %v479
    %v648 = vpack.c.b16 %v486, %v480
    %v649 = vpack.c.b16 %v487, %v481
    %v650 = vpack.c.b16 %v494, %v488
    %v651 = vpack.c.b16 %v495, %v489
    %v652 = vpack.c.b16 %v496, %v490
    %v653 = vpack.c.b16 %v497, %v491
    %v654 = vpack.c.b16 %v498, %v492
    %v655 = vpack.c.b16 %v499, %v493
    %v656 = vpack.c.b16 %v506, %v500
    %v657 = vpack.c.b16 %v507, %v501
    %v658 = vpack.c.b16 %v508, %v502
    %v659 = vpack.c.b16 %v509, %v503
    %v660 = vpack.c.b16 %v510, %v504
    %v661 = vpack.c.b16 %v511, %v505
    %v662 = vpack.c.b16 %v518, %v512
    %v663 = vpack.c.b16 %v519, %v513
    %v664 = vpack.c.b16 %v520, %v514
    %v665 = vpack.c.b16 %v521, %v515
    %v666 = vpack.c.b16 %v522, %v516
    %v667 = vpack.c.b16 %v523, %v517
    %v668 = vpack.c.b16 %v530, %v524
    %v669 = vpack.c.b16 %v531, %v525
    %v670 = vpack.c.b16 %v532, %v526
    %v671 = vpack.c.b16 %v533, %v527
    %v672 = vpack.c.b16 %v534, %v528
    %v673 = vpack.c.b16 %v535, %v529
    %v674 = vpack.c.b16 %v542, %v536
    %v675 = vpack.c.b16 %v543, %v537
    %v676 = vpack.c.b16 %v544, %v538
    %v677 = vpack.c.b16 %v545, %v539
    %v678 = vpack.c.b16 %v546, %v540
    %v679 = vpack.c.b16 %v547, %v541
    %v680 = vpack.c.b16 %v554, %v548
    %v681 = vpack.c.b16 %v555, %v549
    %v682 = vpack.c.b16 %v556, %v550
    %v683 = vpack.c.b16 %v557, %v551
    %v684 = vpack.c.b16 %v558, %v552
    %v685 = vpack.c.b16 %v559, %v553
    %v686 = vpack.c.b16 %v566, %v560
    %v687 = vpack.c.b16 %v567, %v561
    %v688 = vpack.c.b16 %v568, %v562
    %v689 = vpack.c.b16 %v569, %v563
    %v690 = vpack.c.b16 %v570, %v564
    %v691 = vpack.c.b16 %v571, %v565
    %v692 = vpack.c.b16 %v578, %v572
    %v693 = vpack.c.b16 %v579, %v573
    %v694 = vpack.c.b16 %v580, %v574
    %v695 = vpack.c.b16 %v581, %v575
    %v696 = vpack.c.b16 %v582, %v576
    %v697 = vpack.c.b16 %v583, %v577
    %v698 = vpack.c.b16 %v590, %v584
    %v699 = vpack.c.b16 %v591, %v585
    %v700 = vpack.c.b16 %v592, %v586
    %v701 = vpack.c.b16 %v593, %v587
    %v702 = vpack.c.b16 %v594, %v588
    %v703 = vpack.c.b16 %v595, %v589
    %v704 = vpack.c.b16 %v602, %v596
    %v705 = vpack.c.b16 %v603, %v597
    %v706 = vpack.c.b16 %v604, %v598
    %v707 = vpack.c.b16 %v605, %v599
    %v708 = vpack.c.b16 %v606, %v600
    %v709 = vpack.c.b16 %v607, %v601
    %v710 = vpack.c.b16 %v614, %v608
    %v711 = vpack.c.b16 %v615, %v609
    %v712 = vpack.c.b16 %v616, %v610
    %v713 = vpack.c.b16 %v617, %v611
    %v714 = vpack.c.b16 %v618, %v612
    %v715 = vpack.c.b16 %v619, %v613
    %812 = vmatprep.subr.bf16.mxu0 %v663
    %813 = vmatpush1.bf16.msra.mxu0 %v662
    %814 = vmatprep.subr.bf16.mxu0 %v657
    %815 = vmatpush1.bf16.msra.mxu0 %v656
    %816 = vmatprep.subr.bf16.mxu0 %v651
    %817 = vmatpush1.bf16.msra.mxu0 %v650
    %818 = vmatprep.subr.bf16.mxu0 %v645
    %819 = vmatpush1.bf16.msra.mxu0 %v644
    %820 = vmatprep.subr.bf16.mxu0 %v639
    %821 = vmatpush1.bf16.msra.mxu0 %v638
    %822 = vmatprep.subr.bf16.mxu0 %v633
    %823 = vmatpush1.bf16.msra.mxu0 %v632
    %824 = vmatprep.subr.bf16.mxu0 %v627
    %825 = vmatpush1.bf16.msra.mxu0 %v626
    %826 = vmatprep.subr.bf16.mxu0 %v621
    %827 = vmatpush1.bf16.msra.mxu0 %v620
    %828 = vmatprep.subr.bf16.mxu0 %v711
    %829 = vmatpush2.bf16.msra.mxu0 %v710
    %830 = vmatprep.subr.bf16.mxu0 %v705
    %831 = vmatpush2.bf16.msra.mxu0 %v704
    %832 = vmatprep.subr.bf16.mxu0 %v699
    %833 = vmatpush2.bf16.msra.mxu0 %v698
    %834 = vmatprep.subr.bf16.mxu0 %v693
    %835 = vmatpush2.bf16.msra.mxu0 %v692
    %836 = vmatprep.subr.bf16.mxu0 %v687
    %837 = vmatpush2.bf16.msra.mxu0 %v686
    %838 = vmatprep.subr.bf16.mxu0 %v681
    %839 = vmatpush2.bf16.msra.mxu0 %v680
    %840 = vmatprep.subr.bf16.mxu0 %v675
    %841 = vmatpush2.bf16.msra.mxu0 %v674
    %842 = vmatprep.subr.bf16.mxu0 %v669
    %843 = vmatpush2.bf16.msra.mxu0 %v668
    %844 = vmatprep.mubr.bf16.mxu0 %v203
    %845 = vmatmul.mubr.bf16.gmra.mxu0 %v202
    %v846 = vpop.f32.mrf.mxu0
    %v847 = vadd.f32 %v305, %v846
    %v848 = vpop.f32.mrf.mxu0
    %v849 = vadd.f32 %v309, %v848
    %v850 = vpop.f32.mrf.mxu0
    %v851 = vpop.f32.mrf.mxu0
    %852 = vdwg.mxu0
    %853 = vmatprep.subr.bf16.mxu0 %v665
    %854 = vmatpush1.bf16.msra.mxu0 %v664
    %855 = vmatprep.subr.bf16.mxu0 %v659
    %856 = vmatpush1.bf16.msra.mxu0 %v658
    %857 = vmatprep.subr.bf16.mxu0 %v653
    %858 = vmatpush1.bf16.msra.mxu0 %v652
    %859 = vmatprep.subr.bf16.mxu0 %v647
    %860 = vmatpush1.bf16.msra.mxu0 %v646
    %861 = vmatprep.subr.bf16.mxu0 %v641
    %862 = vmatpush1.bf16.msra.mxu0 %v640
    %863 = vmatprep.subr.bf16.mxu0 %v635
    %864 = vmatpush1.bf16.msra.mxu0 %v634
    %865 = vmatprep.subr.bf16.mxu0 %v629
    %866 = vmatpush1.bf16.msra.mxu0 %v628
    %867 = vmatprep.subr.bf16.mxu0 %v623
    %868 = vmatpush1.bf16.msra.mxu0 %v622
    %869 = vmatprep.subr.bf16.mxu0 %v713
    %870 = vmatpush2.bf16.msra.mxu0 %v712
    %871 = vmatprep.subr.bf16.mxu0 %v707
    %872 = vmatpush2.bf16.msra.mxu0 %v706
    %873 = vmatprep.subr.bf16.mxu0 %v701
    %874 = vmatpush2.bf16.msra.mxu0 %v700
    %875 = vmatprep.subr.bf16.mxu0 %v695
    %876 = vmatpush2.bf16.msra.mxu0 %v694
    %877 = vmatprep.subr.bf16.mxu0 %v689
    %878 = vmatpush2.bf16.msra.mxu0 %v688
    %879 = vmatprep.subr.bf16.mxu0 %v683
    %880 = vmatpush2.bf16.msra.mxu0 %v682
    %881 = vmatprep.subr.bf16.mxu0 %v677
    %882 = vmatpush2.bf16.msra.mxu0 %v676
    %883 = vmatprep.subr.bf16.mxu0 %v671
    %884 = vmatpush2.bf16.msra.mxu0 %v670
    %885 = vmatprep.mubr.bf16.mxu0 %v203
    %886 = vmatmul.mubr.bf16.gmra.mxu0 %v202
    %v887 = vpop.f32.mrf.mxu0
    %v888 = vadd.f32 %v313, %v887
    %v889 = vpop.f32.mrf.mxu0
    %v890 = vadd.f32 %v317, %v889
    %v891 = vpop.f32.mrf.mxu0
    %v892 = vpop.f32.mrf.mxu0
    %893 = vdwg.mxu0
    %894 = vmatprep.subr.bf16.mxu0 %v667
    %895 = vmatpush1.bf16.msra.mxu0 %v666
    %896 = vmatprep.subr.bf16.mxu0 %v661
    %897 = vmatpush1.bf16.msra.mxu0 %v660
    %898 = vmatprep.subr.bf16.mxu0 %v655
    %899 = vmatpush1.bf16.msra.mxu0 %v654
    %900 = vmatprep.subr.bf16.mxu0 %v649
    %901 = vmatpush1.bf16.msra.mxu0 %v648
    %902 = vmatprep.subr.bf16.mxu0 %v643
    %903 = vmatpush1.bf16.msra.mxu0 %v642
    %904 = vmatprep.subr.bf16.mxu0 %v637
    %905 = vmatpush1.bf16.msra.mxu0 %v636
    %906 = vmatprep.subr.bf16.mxu0 %v631
    %907 = vmatpush1.bf16.msra.mxu0 %v630
    %908 = vmatprep.subr.bf16.mxu0 %v625
    %909 = vmatpush1.bf16.msra.mxu0 %v624
    %910 = vmatprep.subr.bf16.mxu0 %v715
    %911 = vmatpush2.bf16.msra.mxu0 %v714
    %912 = vmatprep.subr.bf16.mxu0 %v709
    %913 = vmatpush2.bf16.msra.mxu0 %v708
    %914 = vmatprep.subr.bf16.mxu0 %v703
    %915 = vmatpush2.bf16.msra.mxu0 %v702
    %916 = vmatprep.subr.bf16.mxu0 %v697
    %917 = vmatpush2.bf16.msra.mxu0 %v696
    %918 = vmatprep.subr.bf16.mxu0 %v691
    %919 = vmatpush2.bf16.msra.mxu0 %v690
    %920 = vmatprep.subr.bf16.mxu0 %v685
    %921 = vmatpush2.bf16.msra.mxu0 %v684
    %922 = vmatprep.subr.bf16.mxu0 %v679
    %923 = vmatpush2.bf16.msra.mxu0 %v678
    %924 = vmatprep.subr.bf16.mxu0 %v673
    %925 = vmatpush2.bf16.msra.mxu0 %v672
    %926 = vmatprep.mubr.bf16.mxu0 %v203
    %927 = vmatmul.mubr.bf16.gmra.mxu0 %v202
    %v928 = vpop.f32.mrf.mxu0
    %v929 = vadd.f32 %v321, %v928
    %v930 = vpop.f32.mrf.mxu0
    %v931 = vadd.f32 %v325, %v930
    %v932 = vpop.f32.mrf.mxu0
    %v933 = vpop.f32.mrf.mxu0
    %934 = vdwg.mxu0
    %v935 = vpack.c.bf16 %v847, %v847
    %v936 = vpack.c.bf16 %v849, %v849
    %v937 = vpack.c.bf16 %v888, %v888
    %v938 = vpack.c.bf16 %v890, %v890
    %v939 = vpack.c.bf16 %v929, %v929
    %v940 = vpack.c.bf16 %v931, %v931
    %v947 = vunpack.c.l.b16 %v935
    %v948 = vunpack.c.l.b16 %v936
    %v949 = vunpack.c.l.b16 %v937
    %v950 = vunpack.c.l.b16 %v938
    %v951 = vunpack.c.l.b16 %v939
    %v952 = vunpack.c.l.b16 %v940
    %v953 = vpack.c.b16 %v948, %v947
    %v954 = vpack.c.b16 %v950, %v949
    %v955 = vpack.c.b16 %v952, %v951
    %959 = vst [vmem:[#allocation7] sm:$0xff] %v953
    %960 = vst [vmem:[#allocation7 + $0x8] sm:$0xff] %v954
    %961 = vst [vmem:[#allocation7 + $0x10] sm:$0xff] %v955
    // Predicated region
    $region30: #{mlp_feature_extractor.1} parent=1 // pred_check
      _
    $region31: #{mlp_feature_extractor.1} parent=1 // pred_check_branch
      %963 = sbr.rel (0) target = $region33
    $region32: #{mlp_feature_extractor.1} parent=1 // pred_region
      %s965 = ssub.s32 384, 384
      %966 = vsyncadd [#allocation4], %s965
      %s968 = sshll.u32 [#allocation7], 4
      %s969 = int_to_ptr.vmem [resolvable:$true] %s968
      %971 = dma.vmem_to_hbm [thread:$0]  %s969, 384, %s5, [#allocation4]
    $region33: #{mlp_feature_extractor.1} parent=1 // pred_fallthru
      _
    // Predicated region
    $region34: #{mlp_feature_extractor.1} parent=1 // pred_check
      _
    $region35: #{mlp_feature_extractor.1} parent=1 // pred_check_branch
      %973 = sbr.rel (0) target = $region37
    $region36: #{mlp_feature_extractor.1} parent=1 // pred_region
      %974 = dma.done [#allocation4], 384
    $region37: #{mlp_feature_extractor.1} parent=1 // pred_fallthru
      _
    %975 = vsyncpa [#allocation3], 1
    %976 = vsyncpa [#allocation6], 1
    %977 = vsyncpa [#allocation4], 1

</llo_original>
